<compile_context>
chip_gen: v7x
topology: tpu7x:2x2x1
jax: 0.10.0
libtpu: 0.0.40
codegen_flags: <defaults>
</compile_context>

<pallas_src>
import math

import jax
import jax.numpy as jnp
from jax.experimental import pallas as pl
from jax.experimental.pallas import tpu as pltpu


def _round_up(x, m):
    return ((x + m - 1) // m) * m


def _vmem_capacity_bytes():
    """Physical per-core VMEM, with a conservative fallback (v7x = 64 MiB)."""
    try:
        info = pltpu.get_tpu_info()
        cap = getattr(info, "vmem_capacity_bytes", None)
        if cap:
            return int(cap)
    except Exception:
        pass
    return 64 * 1024 * 1024


def _largest_div_mult128(K, cap):
    """Largest multiple-of-128 divisor of K that is <= cap (None if none)."""
    t = (min(cap, K) // 128) * 128
    while t >= 128:
        if K % t == 0:
            return t
        t -= 128
    return None


def _qmeas_kernel(xr_ref, xi_ref, w_ref, o_ref, acc_ref):
    # w_ref = [w_real ; -w_imag] stacked on a leading axis -> (2, tk, E).
    # out = xr @ w_real + xi @ (-w_imag), accumulated in f32 across K tiles.
    @pl.when(pl.program_id(1) == 0)
    def _init():
        acc_ref[...] = jnp.zeros_like(acc_ref)

    acc_ref[...] += (
        jnp.dot(xr_ref[...], w_ref[0], preferred_element_type=jnp.float32)
        + jnp.dot(xi_ref[...], w_ref[1], preferred_element_type=jnp.float32))

    @pl.when(pl.program_id(1) == pl.num_programs(1) - 1)
    def _finalize():
        o_ref[...] = acc_ref[...].astype(o_ref.dtype)


def make_kernel_unitary(embed_dim, dtype=jnp.float32):
    """Deterministic init, exactly as QMeasurement1.__init__: stack([eye, zeros], -1)."""
    return jnp.stack(
        [jnp.eye(embed_dim, dtype=dtype), jnp.zeros((embed_dim, embed_dim), dtype=dtype)],
        axis=-1,
    )


def qmeasurement1_forward(input_real, input_imag, kernel_unitary, *,
                          tm=4096, vmem_budget_bytes=None):
    E = kernel_unitary.shape[0]
    assert input_real.shape == input_imag.shape
    assert input_real.shape[-2:] == (E, E)

    in_dtype = jnp.dtype(input_real.dtype)
    itemsize = in_dtype.itemsize
    sublane = {4: 8, 2: 16, 1: 32}.get(itemsize, 8)

    # --- projector / packed-weight construction (tiny, plain-JAX glue) -------
    rk = kernel_unitary[:, :, 0].astype(jnp.float32)       # (E, E)
    ik = kernel_unitary[:, :, 1].astype(jnp.float32)       # (E, E)
    rk_e = rk[:, :, None]                                   # (E, E, 1)
    ik_e = ik[:, :, None]                                    # (E, E, 1)
    proj_real = (rk_e @ jnp.swapaxes(rk_e, 1, 2)
                 + ik_e @ jnp.swapaxes(ik_e, 1, 2))          # (E, E, E)
    proj_imag = (ik_e @ jnp.swapaxes(rk_e, 1, 2)
                 - rk_e @ jnp.swapaxes(ik_e, 1, 2))          # (E, E, E)
    K = E * E
    w_real = proj_real.reshape(E, K).T                       # (K, E)
    w_imag = proj_imag.reshape(E, K).T                       # (K, E)
    # Pack [w_real ; -w_imag] on a leading axis: no in-kernel subtract, and
    # leading-axis indexing (w_ref[0]/w_ref[1]) is always sublane-aligned.
    w_cat = jnp.stack([w_real, -w_imag], axis=0).astype(in_dtype)   # (2, K, E)

    # --- flatten leading dims + (E, E) -> K -----------------------------------
    lead = input_real.shape[:-2]
    M = math.prod(lead) if lead else 1
    xr = input_real.reshape(M, K)
    xi = input_imag.reshape(M, K)

    # --- generation-aware VMEM budget -----------------------------------------
    phys = _vmem_capacity_bytes()
    default_budget = min(phys // 3, 28 * 1024 * 1024)        # ~21 MiB v7x, 28 MiB v5e/v6e
    budget = int(vmem_budget_bytes) if vmem_budget_bytes is not None else default_budget
    vmem_limit = max(default_budget * 3 // 2, 16 * 1024 * 1024)
    vmem_limit = int(min(vmem_limit, max(phys - 4 * 1024 * 1024, phys // 2)))

    tm_req = _round_up(max(int(tm), sublane), sublane)
    tm_m_cap = _round_up(max(M, 1), sublane)
    # Aim for >= 4 grid steps along M when M permits (2 per TensorCore on v7x).
    tm_steps = max(sublane, _round_up(pl.cdiv(max(M, 1), 4), sublane))
    tm_soft = min(tm_req, tm_m_cap, tm_steps)

    # ---- full-K candidate: account for ALL resident buffers ------------------
    w_bytes = 2 * K * E * itemsize
    # A never-changing weight block > 1 MiB is worth single-buffering.
    single_buffer_w = bool(w_bytes > (1 << 20) and hasattr(pl, "Buffered"))
    w_resident = w_bytes * (1 if single_buffer_w else 2)
    per_row = 4 * K * itemsize + 2 * E * itemsize + 4 * E    # x dbuf + out dbuf + acc
    tm_full_cap = max(0, budget - w_resident) // per_row
    tm_full_cap = (tm_full_cap // sublane) * sublane

    want_tm = max(sublane, min(512, tm_m_cap))
    tk = K
    if tm_full_cap >= want_tm:
        tm_eff = max(sublane, min(tm_soft, tm_full_cap))
    else:
        # ---- K-tiled candidate (accumulator across a trailing K grid axis) ---
        tm_eff = None
        if K >= 128:
            tm_kt = max(sublane, min(tm_soft, 1024))
            fixed = 2 * tm_kt * E * itemsize + 4 * tm_kt * E        # out dbuf + acc
            per_tk = 4 * tm_kt * itemsize + 4 * E * itemsize        # x dbuf + w dbuf
            tk_cap = max(0, budget - fixed) // per_tk
            tk_sel = _largest_div_mult128(K, tk_cap)
            if tk_sel is not None:
                tm_eff, tk, single_buffer_w = tm_kt, tk_sel, False
        if tm_eff is None:
            # TODO(synk): K with no multiple-of-128 divisor falls back to the
            # untiled-K path (small tm) instead of masking a ragged K block.
            tm_eff = max(sublane, min(tm_soft, max(tm_full_cap, sublane)))
            tk = K

    grid_m = pl.cdiv(M, tm_eff)          # ragged last M block is masked by Pallas
    grid_k = K // tk                     # tk divides K exactly
    grid = (grid_m, grid_k)

    # Advisory cost: HBM-bound stream (2 reads of (M, K), 1 write of (M, E)).
    flops = 2 * 2 * M * K * E
    bytes_accessed = (2 * M * K + M * E) * itemsize + 2 * K * E * itemsize
    cost = pl.CostEstimate(flops=flops, transcendentals=0,
                           bytes_accessed=bytes_accessed)

    w_spec_kwargs = {}
    if single_buffer_w and grid_k == 1:
        # Constant block for every grid step -> single-buffer it (halves its
        # VMEM footprint for free).  Only reached once the weight is > 1 MiB.
        w_spec_kwargs["pipeline_mode"] = pl.Buffered(1)

    grid_spec = pltpu.PrefetchScalarGridSpec(
        num_scalar_prefetch=0,
        grid=grid,
        in_specs=[
            pl.BlockSpec((tm_eff, tk), lambda i, k: (i, k)),        # x_real tile
            pl.BlockSpec((tm_eff, tk), lambda i, k: (i, k)),        # x_imag tile
            pl.BlockSpec((2, tk, E), lambda i, k: (0, k, 0),        # packed weights
                         **w_spec_kwargs),
        ],
        out_specs=pl.BlockSpec((tm_eff, E), lambda i, k: (i, 0)),
        scratch_shapes=[pltpu.VMEM((tm_eff, E), jnp.float32)],      # f32 accumulator
    )

    out_flat = pl.pallas_call(
        _qmeas_kernel,
        out_shape=jax.ShapeDtypeStruct((M, E), in_dtype),
        grid_spec=grid_spec,
        compiler_params=pltpu.CompilerParams(
            dimension_semantics=("parallel", "arbitrary"),
            vmem_limit_bytes=vmem_limit),
        cost_estimate=cost,
    )(xr, xi, w_cat)

    return out_flat.reshape(*lead, E)


def qmeasurement1_reference(input_real, input_imag, kernel_unitary):
    """Pure-JAX reference mirroring the PyTorch forward."""
    E = kernel_unitary.shape[0]
    rk = kernel_unitary[:, :, 0][:, :, None]
    ik = kernel_unitary[:, :, 1][:, :, None]
    proj_real = rk @ jnp.swapaxes(rk, 1, 2) + ik @ jnp.swapaxes(ik, 1, 2)
    proj_imag = ik @ jnp.swapaxes(rk, 1, 2) - rk @ jnp.swapaxes(ik, 1, 2)
    fr = input_real.reshape(*input_real.shape[:-2], E * E)
    fi = input_imag.reshape(*input_imag.shape[:-2], E * E)
    return (fr @ proj_real.reshape(E, E * E).T
            - fi @ proj_imag.reshape(E, E * E).T)


if __name__ == "__main__":
    key = jax.random.PRNGKey(0)
    B, S, E = 2, 8, 16
    k1, k2, k3, k4, k5 = jax.random.split(key, 5)

    xr = jax.random.normal(k1, (B, S, E, E), dtype=jnp.float32)
    xi = jax.random.normal(k2, (B, S, E, E), dtype=jnp.float32)
    ku_eye = make_kernel_unitary(E)

    # Case 1: identity-unitary init (the module's default), tight tolerance.
    out1 = jax.block_until_ready(qmeasurement1_forward(xr, xi, ku_eye))
    ref1 = qmeasurement1_reference(xr, xi, ku_eye)
    assert out1.shape == (B, S, E)
    assert jnp.allclose(out1, ref1, atol=1e-5, rtol=1e-5), "mismatch (case 1)"

    # Case 2: random kernel_unitary + ragged M=15 -> exercises the cdiv grid /
    # masked final block and the -w_imag sign.  Loose tolerance so the check is
    # insensitive to XLA-vs-MXU f32 matmul precision modes (a sign/transpose
    # bug would be O(20+), far outside this band).
    B2, S2 = 3, 5
    xr2 = jax.random.normal(k3, (B2, S2, E, E), dtype=jnp.float32)
    xi2 = jax.random.normal(k4, (B2, S2, E, E), dtype=jnp.float32)
    ku_rand = jax.random.normal(k5, (E, E, 2), dtype=jnp.float32)
    out2 = jax.block_until_ready(qmeasurement1_forward(xr2, xi2, ku_rand))
    ref2 = qmeasurement1_reference(xr2, xi2, ku_rand)
    assert out2.shape == (B2, S2, E)
    assert jnp.allclose(out2, ref2, atol=5e-1, rtol=1e-2), "mismatch (case 2)"

    # Case 3: tiny VMEM budget forces the K-tiled accumulator path
    # (grid_k > 1, pl.when init/finalize); exact for the identity init.
    out3 = jax.block_until_ready(
        qmeasurement1_forward(xr, xi, ku_eye, vmem_budget_bytes=96 * 1024))
    assert out3.shape == (B, S, E)
    assert jnp.allclose(out3, ref1, atol=1e-5, rtol=1e-5), "mismatch (case 3)"

    # Case 4: bf16 streaming path (kernel is HBM-bound; halving input bytes is
    # ~2x wall time when bf16 density matrices are acceptable).
    out4 = jax.block_until_ready(
        qmeasurement1_forward(xr.astype(jnp.bfloat16), xi.astype(jnp.bfloat16), ku_eye))
    ref4 = qmeasurement1_reference(xr.astype(jnp.bfloat16).astype(jnp.float32),
                                   xi.astype(jnp.bfloat16).astype(jnp.float32), ku_eye)
    assert out4.dtype == jnp.bfloat16
    assert jnp.allclose(out4.astype(jnp.float32), ref4, atol=2e-1, rtol=2e-2), \
        "mismatch (case 4)"

    print("KERNEL_OK")
</pallas_src>

<mosaic_0001>
module attributes {stable_mosaic.version = 11 : i64} {
  func.func @_qmeas_kernel(%arg0: i32, %arg1: i32, %arg2: memref<8x256xf32, #tpu.memory_space<vmem>>, %arg3: memref<8x256xf32, #tpu.memory_space<vmem>>, %arg4: memref<2x256x16xf32, #tpu.memory_space<vmem>>, %arg5: memref<8x16xf32, #tpu.memory_space<vmem>>, %arg6: memref<8x16xf32, #tpu.memory_space<vmem>>) attributes {dimension_semantics = [#tpu.dimension_semantics<parallel>, #tpu.dimension_semantics<arbitrary>], iteration_bounds = array<i64: 2, 1>, scalar_prefetch = 0 : i64, scratch_operands = 1 : i64, tpu.core_type = #tpu.core_type<tc>, window_params = [{transform_indices = @transform_0, window_bounds = array<i64: 8, 256>}, {transform_indices = @transform_1, window_bounds = array<i64: 8, 256>}, {transform_indices = @transform_2, window_bounds = array<i64: 2, 256, 16>}, {transform_indices = @transform_3, window_bounds = array<i64: 8, 16>}]} {
    %c0_i32 = arith.constant 0 : i32
    %0 = arith.cmpi eq, %arg1, %c0_i32 : i32
    %1 = arith.extui %0 : i1 to i32
    %c0_i32_0 = arith.constant 0 : i32
    %2 = arith.cmpi ne, %1, %c0_i32_0 : i32
    scf.if %2 {
      %cst_16 = arith.constant 0.000000e+00 : f32
      %18 = vector.broadcast %cst_16 : f32 to vector<8x16xf32>
      %c0_17 = arith.constant 0 : index
      %c0_18 = arith.constant 0 : index
      %19 = vector.load %arg6[%c0_17, %c0_18] : memref<8x16xf32, #tpu.memory_space<vmem>>, vector<8x16xf32>
      tpu.vector_store %arg6[%c0_17, %c0_18], %18 {strides = array<i32>} : memref<8x16xf32, #tpu.memory_space<vmem>>, vector<8x16xf32>,
    } else {
    }
    %c0 = arith.constant 0 : index
    %c0_1 = arith.constant 0 : index
    %3 = vector.load %arg6[%c0, %c0_1] : memref<8x16xf32, #tpu.memory_space<vmem>>, vector<8x16xf32>
    %c0_2 = arith.constant 0 : index
    %c0_3 = arith.constant 0 : index
    %4 = vector.load %arg2[%c0_2, %c0_3] : memref<8x256xf32, #tpu.memory_space<vmem>>, vector<8x256xf32>
    %c0_4 = arith.constant 0 : index
    %c0_5 = arith.constant 0 : index
    %c0_6 = arith.constant 0 : index
    %5 = vector.load %arg4[%c0_4, %c0_5, %c0_6] : memref<2x256x16xf32, #tpu.memory_space<vmem>>, vector<1x256x16xf32>
    %6 = vector.shape_cast %5 : vector<1x256x16xf32> to vector<256x16xf32>
    %cst = arith.constant dense<0.000000e+00> : vector<8x16xf32>
    %7 = tpu.matmul %4, %6, %cst {dimension_numbers = #tpu.dot_dimension_numbers<[1], [0], [0], [1], [0, 0, 1, 1], [], []>} : vector<8x256xf32>, vector<256x16xf32>, vector<8x16xf32> -> vector<8x16xf32>
    %c0_7 = arith.constant 0 : index
    %c0_8 = arith.constant 0 : index
    %8 = vector.load %arg3[%c0_7, %c0_8] : memref<8x256xf32, #tpu.memory_space<vmem>>, vector<8x256xf32>
    %c1 = arith.constant 1 : index
    %c0_9 = arith.constant 0 : index
    %c0_10 = arith.constant 0 : index
    %9 = vector.load %arg4[%c1, %c0_9, %c0_10] : memref<2x256x16xf32, #tpu.memory_space<vmem>>, vector<1x256x16xf32>
    %10 = vector.shape_cast %9 : vector<1x256x16xf32> to vector<256x16xf32>
    %cst_11 = arith.constant dense<0.000000e+00> : vector<8x16xf32>
    %11 = tpu.matmul %8, %10, %cst_11 {dimension_numbers = #tpu.dot_dimension_numbers<[1], [0], [0], [1], [0, 0, 1, 1], [], []>} : vector<8x256xf32>, vector<256x16xf32>, vector<8x16xf32> -> vector<8x16xf32>
    %12 = arith.addf %7, %11 : vector<8x16xf32>
    %13 = arith.addf %3, %12 : vector<8x16xf32>
    %c0_12 = arith.constant 0 : index
    %c0_13 = arith.constant 0 : index
    %14 = vector.load %arg6[%c0_12, %c0_13] : memref<8x16xf32, #tpu.memory_space<vmem>>, vector<8x16xf32>
    tpu.vector_store %arg6[%c0_12, %c0_13], %13 {strides = array<i32>} : memref<8x16xf32, #tpu.memory_space<vmem>>, vector<8x16xf32>,
    %c0_i32_14 = arith.constant 0 : i32
    %15 = arith.cmpi eq, %arg1, %c0_i32_14 : i32
    %16 = arith.extui %15 : i1 to i32
    %c0_i32_15 = arith.constant 0 : i32
    %17 = arith.cmpi ne, %16, %c0_i32_15 : i32
    scf.if %17 {
      %c0_16 = arith.constant 0 : index
      %c0_17 = arith.constant 0 : index
      %18 = vector.load %arg6[%c0_16, %c0_17] : memref<8x16xf32, #tpu.memory_space<vmem>>, vector<8x16xf32>
      %c0_18 = arith.constant 0 : index
      %c0_19 = arith.constant 0 : index
      %19 = vector.load %arg5[%c0_18, %c0_19] : memref<8x16xf32, #tpu.memory_space<vmem>>, vector<8x16xf32>
      tpu.vector_store %arg5[%c0_18, %c0_19], %18 {strides = array<i32>} : memref<8x16xf32, #tpu.memory_space<vmem>>, vector<8x16xf32>,
    } else {
    }
    return
  }
  func.func @transform_0(%arg0: i32, %arg1: i32) -> (i32, i32) {
    %c0_i32 = arith.constant 0 : i32
    return %arg0, %arg1 : i32, i32
  }
  func.func @transform_1(%arg0: i32, %arg1: i32) -> (i32, i32) {
    %c0_i32 = arith.constant 0 : i32
    return %arg0, %arg1 : i32, i32
  }
  func.func @transform_2(%arg0: i32, %arg1: i32) -> (i32, i32, i32) {
    %c0_i32 = arith.constant 0 : i32
    %c0_i32_0 = arith.constant 0 : i32
    %c0_i32_1 = arith.constant 0 : i32
    return %c0_i32, %arg1, %c0_i32_0 : i32, i32, i32
  }
  func.func @transform_3(%arg0: i32, %arg1: i32) -> (i32, i32) {
    %c0_i32 = arith.constant 0 : i32
    %c0_i32_0 = arith.constant 0 : i32
    return %arg0, %c0_i32 : i32, i32
  }
}

</mosaic_0001>

<llo_original>
// kernel: tpu_custom_call.1
$region0: #{tpu_custom_call.1}
  #allocation0 [shape = 'u32[]', space=smem, size = 0x4, offset = 0x4, fixed_abs, tag = 'smem constant byte address 0x4 - core index']
  #allocation1 [shape = 'u32[144,128]{1,0:T(1,128)}', space=vmem, size = 0x12000, scoped, tag = 'internal scratch']
  #allocation2 [shape = 'f32[8,16]{1,0:T(8,128)}', space=vmem, size = 0x1000, scoped, tag = 'scratch operand']
  %s0 = inlined_call_operand.vmem [shape: f32[16,256], index: 0, kind: input, shape index: {}]
  %s1 = inlined_call_operand.vmem [shape: f32[16,256], index: 1, kind: input, shape index: {}]
  %s2 = inlined_call_operand.vmem [shape: f32[2,256,16], index: 2, kind: input, shape index: {}]
  %s3 = inlined_call_operand.hbm [shape: f32[16,16], index: 3, kind: output, shape index: {}]
  %s4 = sld [smem:[#allocation0]]
  $region53: #{tpu_custom_call.1} parent=0
    _
  %s6 = ssub.s32 1, %s4
  %s7 = scalar_select 0, %s6, %s4
  $region1: #{tpu_custom_call.1} parent=0
    #allocation3 [shape = 'u8[8192]{0}', space=vmem, size = 0x2000, scoped, tag = 'output window, operand 0']
    #allocation4 [shape = 's32[2]{0}', space=sflag, size = 0x8, scoped, tag = 'scoped memory for tpu_custom_call.1']
    %8 = vsyncpa [#allocation4], 0
    %s9 = scalar_lea.sflag [#allocation4], 1
    %10 = vsyncpa %s9, 0
    loop: start=0, step=1, limit=4
    $region2: #{tpu_custom_call.1} parent=1 // loop_pre_header
      _
    $region3: #{tpu_custom_call.1} parent=1 // loop_header
      %s12 = sphi 0, %s16
      %p13 = scmp.ge.s32.totalorder %s12, 4
      %s19 = sphi 0, %s31
      %s20 = sphi 0, %s27
      %s21 = sphi 0, %s19
      %s22 = sphi 0, %s20
      %s23 = sphi 0, %s21
      %s24 = sphi 0, %s22
      %s36 = sphi 0, %s38
      %s39 = sphi 0, %s36
      %s40 = sphi 0, %s39
      %s56 = sphi 0, %s40
      %s64 = sphi 0, %s66
      %s67 = sphi 0, %s64
      %s68 = sphi 0, %s67
      %s84 = sphi 0, %s68
      %s90 = sphi 0, %s92
      %s93 = sphi 0, %s90
      %s94 = sphi 0, %s93
      %s110 = sphi 0, %s94
      %s116 = sphi 0, %s118
      %s119 = sphi 0, %s116
      %s120 = sphi 0, %s119
      %s136 = sphi 0, %s120
    $region4: #{tpu_custom_call.1} parent=1 // loop_header_branch
      %15 = sbr.rel (%p13) target = $region8
    $region5: #{tpu_custom_call.1} parent=1 // loop_body
      %s17 = ssub.s32 %s12, 1
      %s18 = ssub.s32 %s12, 2
      %s25 = sadd.s32 1, %s20
      %p26 = scmp.ge.s32.totalorder %s25, 1
      %s27 = scalar_select %p26, 0, %s25
      %s28 = sadd.s32 1, %s19
      %s29 = scalar_select %p26, %s28, %s19
      %p30 = scmp.ge.s32.totalorder %s29, 2
      %s31 = scalar_select %p30, 0, %s29
      %s32 = ssub.s32 %s19, %s31
      %s33 = ssub.s32 %s20, %s27
      %s34 = sor.u32 %s32, %s33
      %p35 = scmp.eq.s32.totalorder %s34, 0
      %s37 = sadd.s32 %s36, 1
      %s38 = scalar_select %p35, %s36, %s37
      %p41 = pneg %p35
      %p42 = scmp.eq.s32.totalorder %s12, 1
      %p43 = por %p41, %p42
      %p44 = scmp.ne.s32.totalorder %s36, %s39
      %p45 = scmp.eq.s32.totalorder %s12, 0
      %p46 = por %p44, %p45
      %p47 = scmp.ne.s32.totalorder %s36, %s39
      %p48 = scmp.eq.s32.totalorder %s17, 1
      %p49 = por %p47, %p48
      %p50 = scmp.ne.s32.totalorder %s39, %s40
      %p51 = scmp.eq.s32.totalorder %s17, 0
      %p52 = por %p50, %p51
      %p53 = scmp.ne.s32.totalorder %s39, %s40
      %p54 = scmp.eq.s32.totalorder %s18, 1
      %p55 = por %p53, %p54
      %p57 = scmp.ne.s32.totalorder %s40, %s56
      %p58 = scmp.eq.s32.totalorder %s18, 0
      %p59 = por %p57, %p58
      %s60 = ssub.s32 %s19, %s31
      %s61 = ssub.s32 %s20, %s27
      %s62 = sor.u32 %s60, %s61
      %p63 = scmp.eq.s32.totalorder %s62, 0
      %s65 = sadd.s32 %s64, 1
      %s66 = scalar_select %p63, %s64, %s65
      %p69 = pneg %p63
      %p70 = scmp.eq.s32.totalorder %s12, 1
      %p71 = por %p69, %p70
      %p72 = scmp.ne.s32.totalorder %s64, %s67
      %p73 = scmp.eq.s32.totalorder %s12, 0
      %p74 = por %p72, %p73
      %p75 = scmp.ne.s32.totalorder %s64, %s67
      %p76 = scmp.eq.s32.totalorder %s17, 1
      %p77 = por %p75, %p76
      %p78 = scmp.ne.s32.totalorder %s67, %s68
      %p79 = scmp.eq.s32.totalorder %s17, 0
      %p80 = por %p78, %p79
      %p81 = scmp.ne.s32.totalorder %s67, %s68
      %p82 = scmp.eq.s32.totalorder %s18, 1
      %p83 = por %p81, %p82
      %p85 = scmp.ne.s32.totalorder %s68, %s84
      %p86 = scmp.eq.s32.totalorder %s18, 0
      %p87 = por %p85, %p86
      %s88 = ssub.s32 %s20, %s27
      %p89 = scmp.eq.s32.totalorder %s88, 0
      %s91 = sadd.s32 %s90, 1
      %s92 = scalar_select %p89, %s90, %s91
      %p95 = pneg %p89
      %p96 = scmp.eq.s32.totalorder %s12, 1
      %p97 = por %p95, %p96
      %p98 = scmp.ne.s32.totalorder %s90, %s93
      %p99 = scmp.eq.s32.totalorder %s12, 0
      %p100 = por %p98, %p99
      %p101 = scmp.ne.s32.totalorder %s90, %s93
      %p102 = scmp.eq.s32.totalorder %s17, 1
      %p103 = por %p101, %p102
      %p104 = scmp.ne.s32.totalorder %s93, %s94
      %p105 = scmp.eq.s32.totalorder %s17, 0
      %p106 = por %p104, %p105
      %p107 = scmp.ne.s32.totalorder %s93, %s94
      %p108 = scmp.eq.s32.totalorder %s18, 1
      %p109 = por %p107, %p108
      %p111 = scmp.ne.s32.totalorder %s94, %s110
      %p112 = scmp.eq.s32.totalorder %s18, 0
      %p113 = por %p111, %p112
      %s114 = ssub.s32 %s19, %s31
      %p115 = scmp.eq.s32.totalorder %s114, 0
      %s117 = sadd.s32 %s116, 1
      %s118 = scalar_select %p115, %s116, %s117
      %p121 = pneg %p115
      %p122 = scmp.eq.s32.totalorder %s12, 1
      %p123 = por %p121, %p122
      %p124 = scmp.ne.s32.totalorder %s116, %s119
      %p125 = scmp.eq.s32.totalorder %s12, 0
      %p126 = por %p124, %p125
      %p127 = scmp.ne.s32.totalorder %s116, %s119
      %p128 = scmp.eq.s32.totalorder %s17, 1
      %p129 = por %p127, %p128
      %p130 = scmp.ne.s32.totalorder %s119, %s120
      %p131 = scmp.eq.s32.totalorder %s17, 0
      %p132 = por %p130, %p131
      %p133 = scmp.ne.s32.totalorder %s119, %s120
      %p134 = scmp.eq.s32.totalorder %s18, 1
      %p135 = por %p133, %p134
      %p137 = scmp.ne.s32.totalorder %s120, %s136
      %p138 = scmp.eq.s32.totalorder %s18, 0
      %p139 = por %p137, %p138
      %p140 = scmp.le.s32.totalorder 1, %s12
      %p141 = scmp.lt.s32.totalorder %s12, 3
      %p142 = pnand %p140, %p141
      %p143 = pneg %p142
      // Predicated region
      $region9: #{tpu_custom_call.1} parent=5 // pred_check
        _
      $region10: #{tpu_custom_call.1} parent=5 // pred_check_branch
        %145 = sbr.rel (%p142) target = $region12
      $region11: #{tpu_custom_call.1} parent=5 // pred_region
        %s146 = ssub.s32 %s12, 1
        // Predicated region
        $region13: #{tpu_custom_call.1} parent=11 // pred_check
          %p147 = pneg %p106
        $region14: #{tpu_custom_call.1} parent=11 // pred_check_branch
          %149 = sbr.rel (%p147) target = $region16
        $region15: #{tpu_custom_call.1} parent=11 // pred_region
          %s150 = smul.u32 32, %s22
          %p151 = scmp.lt.s32.totalorder %s150, 31
          %s152 = scalar_select %p151, %s150, 31
          %s153 = smul.addr %s152, 8
          %s154 = scalar_lea.vmem %s2, %s153
          %s155 = smul.u32 32, %s22
        $region16: #{tpu_custom_call.1} parent=11 // pred_fallthru
          _
      $region12: #{tpu_custom_call.1} parent=5 // pred_fallthru
        _
      %p156 = scmp.lt.s32.totalorder %s12, 2
      // Predicated region
      $region17: #{tpu_custom_call.1} parent=5 // pred_check
        %p157 = pneg %p156
      $region18: #{tpu_custom_call.1} parent=5 // pred_check_branch
        %159 = sbr.rel (%p157) target = $region20
      $region19: #{tpu_custom_call.1} parent=5 // pred_region
        // Predicated region
        $region21: #{tpu_custom_call.1} parent=19 // pred_check
          %p160 = pneg %p46
        $region22: #{tpu_custom_call.1} parent=19 // pred_check_branch
          %162 = sbr.rel (%p160) target = $region24
        $region23: #{tpu_custom_call.1} parent=19 // pred_region
          %s163 = smul.u32 2, %s20
          %p164 = scmp.lt.s32.totalorder %s19, 1
          %s165 = scalar_select %p164, %s19, 1
          %p166 = scmp.lt.s32.totalorder %s163, 1
          %s167 = scalar_select %p166, %s163, 1
          %s168 = smul.addr %s165, 2
          %s169 = sadd.s32 %s167, %s168
          %s170 = smul.addr %s169, 8
          %s171 = scalar_lea.vmem %s0, %s170
          %s172 = smul.u32 2, %s20
        $region24: #{tpu_custom_call.1} parent=19 // pred_fallthru
          _
        // Predicated region
        $region25: #{tpu_custom_call.1} parent=19 // pred_check
          %p173 = pneg %p74
        $region26: #{tpu_custom_call.1} parent=19 // pred_check_branch
          %175 = sbr.rel (%p173) target = $region28
        $region27: #{tpu_custom_call.1} parent=19 // pred_region
          %s176 = smul.u32 2, %s20
          %p177 = scmp.lt.s32.totalorder %s19, 1
          %s178 = scalar_select %p177, %s19, 1
          %p179 = scmp.lt.s32.totalorder %s176, 1
          %s180 = scalar_select %p179, %s176, 1
          %s181 = smul.addr %s178, 2
          %s182 = sadd.s32 %s180, %s181
          %s183 = smul.addr %s182, 8
          %s184 = scalar_lea.vmem %s1, %s183
          %s185 = smul.u32 2, %s20
        $region28: #{tpu_custom_call.1} parent=19 // pred_fallthru
          _
      $region20: #{tpu_custom_call.1} parent=5 // pred_fallthru
        _
      %p186 = scmp.le.s32.totalorder 1, %s12
      %p187 = scmp.lt.s32.totalorder %s12, 3
      %p188 = pnand %p186, %p187
      %p189 = pneg %p188
      // Predicated region
      $region29: #{tpu_custom_call.1} parent=5 // pred_check
        _
      $region30: #{tpu_custom_call.1} parent=5 // pred_check_branch
        %191 = sbr.rel (%p188) target = $region32
      $region31: #{tpu_custom_call.1} parent=5 // pred_region
        %s192 = ssub.s32 %s12, 1
        %s193 = smul.u32 2, %s22
        %p194 = scmp.lt.s32.totalorder %s21, 1
        %s195 = scalar_select %p194, %s21, 1
        %p196 = scmp.lt.s32.totalorder %s193, 1
        %s197 = scalar_select %p196, %s193, 1
        %s198 = smul.addr %s195, 2
        %s199 = sadd.s32 %s197, %s198
        %s200 = smul.addr %s199, 8
        %s201 = scalar_lea.vmem %s0, %s200
        %p202 = pneg %p52
        %p203 = pneg %p49
        %s204 = smul.u32 2, %s22
        %p205 = scmp.lt.s32.totalorder %s21, 1
        %s206 = scalar_select %p205, %s21, 1
        %p207 = scmp.lt.s32.totalorder %s204, 1
        %s208 = scalar_select %p207, %s204, 1
        %s209 = smul.addr %s206, 2
        %s210 = sadd.s32 %s208, %s209
        %s211 = smul.addr %s210, 8
        %s212 = scalar_lea.vmem %s1, %s211
        %p213 = pneg %p80
        %p214 = pneg %p77
        %s215 = smul.u32 32, %s22
        %p216 = scmp.lt.s32.totalorder %s215, 31
        %s217 = scalar_select %p216, %s215, 31
        %s218 = smul.addr %s217, 8
        %s219 = scalar_lea.vmem %s2, %s218
        %p220 = pneg %p106
        %p221 = pneg %p103
        %p222 = pneg %p132
        %p223 = pneg %p129
        %s224 = sand.u32 %s119, 1
        %s225 = scalar_lea.sflag [#allocation4], %s224
        %s226 = sand.u32 %s119, 1
        %s227 = smul.addr %s226, 8
        %s228 = scalar_lea.vmem [#allocation3], %s227
        %s229 = smul.u32 2, %s22
        %p230 = scmp.lt.s32.totalorder %s21, 1
        %s231 = scalar_select %p230, %s21, 1
        %p232 = scmp.lt.s32.totalorder %s229, 1
        %s233 = scalar_select %p232, %s229, 1
        %s234 = smul.addr %s231, 2
        %s235 = sadd.s32 %s233, %s234
        %s236 = smul.addr %s235, 8
        %s237 = scalar_lea.vmem %s0, %s236
        %s238 = smul.u32 2, %s22
        %s239 = smul.u32 2, %s22
        %p240 = scmp.lt.s32.totalorder %s21, 1
        %s241 = scalar_select %p240, %s21, 1
        %p242 = scmp.lt.s32.totalorder %s239, 1
        %s243 = scalar_select %p242, %s239, 1
        %s244 = smul.addr %s241, 2
        %s245 = sadd.s32 %s243, %s244
        %s246 = smul.addr %s245, 8
        %s247 = scalar_lea.vmem %s1, %s246
        %s248 = smul.u32 2, %s22
        %s249 = smul.u32 32, %s22
        %p250 = scmp.lt.s32.totalorder %s249, 31
        %s251 = scalar_select %p250, %s249, 31
        %s252 = smul.addr %s251, 8
        %s253 = scalar_lea.vmem %s2, %s252
        %s254 = smul.u32 32, %s22
        %p255 = scmp.eq.s32.totalorder %s22, 0
        // Predicated region
        $region33: #{tpu_custom_call.1} parent=31 // pred_check
          %p256 = pneg %p255
        $region34: #{tpu_custom_call.1} parent=31 // pred_check_branch
          %258 = sbr.rel (%p256) target = $region36
        $region35: #{tpu_custom_call.1} parent=31 // pred_region
          %vm259 = vcmask 130048
          %260 = vst.msk [vmem:[#allocation2] sm:$0xff] %vm259, 0.0
        $region36: #{tpu_custom_call.1} parent=31 // pred_fallthru
          _
        %v261 = vld [vmem:[#allocation2] sm:$0xff]
        %v262 = vld [vmem:[%s237] sm:$0xff]
        %v263 = vld [vmem:[%s237 + $0x8] sm:$0xff]
        %v264 = vld [vmem:[%s253] sm:$0xff]
        %v265 = vld [vmem:[%s253 + $0x8] sm:$0xff]
        %v266 = vld [vmem:[%s253 + $0x10] sm:$0xff]
        %v267 = vld [vmem:[%s253 + $0x18] sm:$0xff]
        %v268 = vld [vmem:[%s253 + $0x20] sm:$0xff]
        %v269 = vld [vmem:[%s253 + $0x28] sm:$0xff]
        %v270 = vld [vmem:[%s253 + $0x30] sm:$0xff]
        %v271 = vld [vmem:[%s253 + $0x38] sm:$0xff]
        %v272 = vld [vmem:[%s253 + $0x40] sm:$0xff]
        %v273 = vld [vmem:[%s253 + $0x48] sm:$0xff]
        %v274 = vld [vmem:[%s253 + $0x50] sm:$0xff]
        %v275 = vld [vmem:[%s253 + $0x58] sm:$0xff]
        %v276 = vld [vmem:[%s253 + $0x60] sm:$0xff]
        %v277 = vld [vmem:[%s253 + $0x68] sm:$0xff]
        %v278 = vld [vmem:[%s253 + $0x70] sm:$0xff]
        %v279 = vld [vmem:[%s253 + $0x78] sm:$0xff]
        %v280 = vld [vmem:[%s253 + $0x80] sm:$0xff]
        %v281 = vld [vmem:[%s253 + $0x88] sm:$0xff]
        %v282 = vld [vmem:[%s253 + $0x90] sm:$0xff]
        %v283 = vld [vmem:[%s253 + $0x98] sm:$0xff]
        %v284 = vld [vmem:[%s253 + $0xa0] sm:$0xff]
        %v285 = vld [vmem:[%s253 + $0xa8] sm:$0xff]
        %v286 = vld [vmem:[%s253 + $0xb0] sm:$0xff]
        %v287 = vld [vmem:[%s253 + $0xb8] sm:$0xff]
        %v288 = vld [vmem:[%s253 + $0xc0] sm:$0xff]
        %v289 = vld [vmem:[%s253 + $0xc8] sm:$0xff]
        %v290 = vld [vmem:[%s253 + $0xd0] sm:$0xff]
        %v291 = vld [vmem:[%s253 + $0xd8] sm:$0xff]
        %v292 = vld [vmem:[%s253 + $0xe0] sm:$0xff]
        %v293 = vld [vmem:[%s253 + $0xe8] sm:$0xff]
        %v294 = vld [vmem:[%s253 + $0xf0] sm:$0xff]
        %v295 = vld [vmem:[%s253 + $0xf8] sm:$0xff]
        %v296 = vld [vmem:[%s247] sm:$0xff]
        %v297 = vld [vmem:[%s247 + $0x8] sm:$0xff]
        %s298 = scalar_lea.vmem %s253, 256
        %v299 = vld [vmem:[%s298] sm:$0xff]
        %v300 = vld [vmem:[%s298 + $0x8] sm:$0xff]
        %v301 = vld [vmem:[%s298 + $0x10] sm:$0xff]
        %v302 = vld [vmem:[%s298 + $0x18] sm:$0xff]
        %v303 = vld [vmem:[%s298 + $0x20] sm:$0xff]
        %v304 = vld [vmem:[%s298 + $0x28] sm:$0xff]
        %v305 = vld [vmem:[%s298 + $0x30] sm:$0xff]
        %v306 = vld [vmem:[%s298 + $0x38] sm:$0xff]
        %v307 = vld [vmem:[%s298 + $0x40] sm:$0xff]
        %v308 = vld [vmem:[%s298 + $0x48] sm:$0xff]
        %v309 = vld [vmem:[%s298 + $0x50] sm:$0xff]
        %v310 = vld [vmem:[%s298 + $0x58] sm:$0xff]
        %v311 = vld [vmem:[%s298 + $0x60] sm:$0xff]
        %v312 = vld [vmem:[%s298 + $0x68] sm:$0xff]
        %v313 = vld [vmem:[%s298 + $0x70] sm:$0xff]
        %v314 = vld [vmem:[%s298 + $0x78] sm:$0xff]
        %v315 = vld [vmem:[%s298 + $0x80] sm:$0xff]
        %v316 = vld [vmem:[%s298 + $0x88] sm:$0xff]
        %v317 = vld [vmem:[%s298 + $0x90] sm:$0xff]
        %v318 = vld [vmem:[%s298 + $0x98] sm:$0xff]
        %v319 = vld [vmem:[%s298 + $0xa0] sm:$0xff]
        %v320 = vld [vmem:[%s298 + $0xa8] sm:$0xff]
        %v321 = vld [vmem:[%s298 + $0xb0] sm:$0xff]
        %v322 = vld [vmem:[%s298 + $0xb8] sm:$0xff]
        %v323 = vld [vmem:[%s298 + $0xc0] sm:$0xff]
        %v324 = vld [vmem:[%s298 + $0xc8] sm:$0xff]
        %v325 = vld [vmem:[%s298 + $0xd0] sm:$0xff]
        %v326 = vld [vmem:[%s298 + $0xd8] sm:$0xff]
        %v327 = vld [vmem:[%s298 + $0xe0] sm:$0xff]
        %v328 = vld [vmem:[%s298 + $0xe8] sm:$0xff]
        %v329 = vld [vmem:[%s298 + $0xf0] sm:$0xff]
        %v330 = vld [vmem:[%s298 + $0xf8] sm:$0xff]
        %331 = vmatprep.subr.mxu0 0.0
        %332 = vmatpush1.msra.mxu0 %v299
        %333 = vmatprep.subr.mxu0 0.0
        %334 = vmatpush1.msra.mxu0 %v300
        %335 = vmatprep.subr.mxu0 0.0
        %336 = vmatpush1.msra.mxu0 %v301
        %337 = vmatprep.subr.mxu0 0.0
        %338 = vmatpush1.msra.mxu0 %v302
        %339 = vmatprep.subr.mxu0 0.0
        %340 = vmatpush1.msra.mxu0 %v303
        %341 = vmatprep.subr.mxu0 0.0
        %342 = vmatpush1.msra.mxu0 %v304
        %343 = vmatprep.subr.mxu0 0.0
        %344 = vmatpush1.msra.mxu0 %v305
        %345 = vmatprep.subr.mxu0 0.0
        %346 = vmatpush1.msra.mxu0 %v306
        %347 = vmatprep.subr.mxu0 0.0
        %348 = vmatpush1.msra.mxu0 %v307
        %349 = vmatprep.subr.mxu0 0.0
        %350 = vmatpush1.msra.mxu0 %v308
        %351 = vmatprep.subr.mxu0 0.0
        %352 = vmatpush1.msra.mxu0 %v309
        %353 = vmatprep.subr.mxu0 0.0
        %354 = vmatpush1.msra.mxu0 %v310
        %355 = vmatprep.subr.mxu0 0.0
        %356 = vmatpush1.msra.mxu0 %v311
        %357 = vmatprep.subr.mxu0 0.0
        %358 = vmatpush1.msra.mxu0 %v312
        %359 = vmatprep.subr.mxu0 0.0
        %360 = vmatpush1.msra.mxu0 %v313
        %361 = vmatprep.subr.mxu0 0.0
        %362 = vmatpush1.msra.mxu0 %v314
        %363 = vmatprep.subr.mxu0 0.0
        %364 = vmatpush1.msra.mxu0 %v315
        %365 = vmatprep.subr.mxu0 0.0
        %366 = vmatpush1.msra.mxu0 %v316
        %367 = vmatprep.subr.mxu0 0.0
        %368 = vmatpush1.msra.mxu0 %v317
        %369 = vmatprep.subr.mxu0 0.0
        %370 = vmatpush1.msra.mxu0 %v318
        %371 = vmatprep.subr.mxu0 0.0
        %372 = vmatpush1.msra.mxu0 %v319
        %373 = vmatprep.subr.mxu0 0.0
        %374 = vmatpush1.msra.mxu0 %v320
        %375 = vmatprep.subr.mxu0 0.0
        %376 = vmatpush1.msra.mxu0 %v321
        %377 = vmatprep.subr.mxu0 0.0
        %378 = vmatpush1.msra.mxu0 %v322
        %379 = vmatprep.subr.mxu0 0.0
        %380 = vmatpush1.msra.mxu0 %v323
        %381 = vmatprep.subr.mxu0 0.0
        %382 = vmatpush1.msra.mxu0 %v324
        %383 = vmatprep.subr.mxu0 0.0
        %384 = vmatpush1.msra.mxu0 %v325
        %385 = vmatprep.subr.mxu0 0.0
        %386 = vmatpush1.msra.mxu0 %v326
        %387 = vmatprep.subr.mxu0 0.0
        %388 = vmatpush1.msra.mxu0 %v327
        %389 = vmatprep.subr.mxu0 0.0
        %390 = vmatpush1.msra.mxu0 %v328
        %391 = vmatprep.subr.mxu0 0.0
        %392 = vmatpush1.msra.mxu0 %v329
        %393 = vmatprep.subr.mxu0 0.0
        %394 = vmatpush1.msra.mxu0 %v330
        %395 = vmatprep.mubr.f32.mxu0 %v297
        %396 = vmatmul.mubr.f32.gmra.mrb[0].mxu0 %v296
        %v397 = vpop.f32.mrb[0].mxu0
        %v398 = vadd.f32 0.0, %v397
        %v399 = vpop.f32.mrb[0].mxu0
        %400 = vdwg.mxu0
        %401 = vmatprep.subr.mxu0 0.0
        %402 = vmatpush1.msra.mxu0 %v264
        %403 = vmatprep.subr.mxu0 0.0
        %404 = vmatpush1.msra.mxu0 %v265
        %405 = vmatprep.subr.mxu0 0.0
        %406 = vmatpush1.msra.mxu0 %v266
        %407 = vmatprep.subr.mxu0 0.0
        %408 = vmatpush1.msra.mxu0 %v267
        %409 = vmatprep.subr.mxu0 0.0
        %410 = vmatpush1.msra.mxu0 %v268
        %411 = vmatprep.subr.mxu0 0.0
        %412 = vmatpush1.msra.mxu0 %v269
        %413 = vmatprep.subr.mxu0 0.0
        %414 = vmatpush1.msra.mxu0 %v270
        %415 = vmatprep.subr.mxu0 0.0
        %416 = vmatpush1.msra.mxu0 %v271
        %417 = vmatprep.subr.mxu0 0.0
        %418 = vmatpush1.msra.mxu0 %v272
        %419 = vmatprep.subr.mxu0 0.0
        %420 = vmatpush1.msra.mxu0 %v273
        %421 = vmatprep.subr.mxu0 0.0
        %422 = vmatpush1.msra.mxu0 %v274
        %423 = vmatprep.subr.mxu0 0.0
        %424 = vmatpush1.msra.mxu0 %v275
        %425 = vmatprep.subr.mxu0 0.0
        %426 = vmatpush1.msra.mxu0 %v276
        %427 = vmatprep.subr.mxu0 0.0
        %428 = vmatpush1.msra.mxu0 %v277
        %429 = vmatprep.subr.mxu0 0.0
        %430 = vmatpush1.msra.mxu0 %v278
        %431 = vmatprep.subr.mxu0 0.0
        %432 = vmatpush1.msra.mxu0 %v279
        %433 = vmatprep.subr.mxu0 0.0
        %434 = vmatpush1.msra.mxu0 %v280
        %435 = vmatprep.subr.mxu0 0.0
        %436 = vmatpush1.msra.mxu0 %v281
        %437 = vmatprep.subr.mxu0 0.0
        %438 = vmatpush1.msra.mxu0 %v282
        %439 = vmatprep.subr.mxu0 0.0
        %440 = vmatpush1.msra.mxu0 %v283
        %441 = vmatprep.subr.mxu0 0.0
        %442 = vmatpush1.msra.mxu0 %v284
        %443 = vmatprep.subr.mxu0 0.0
        %444 = vmatpush1.msra.mxu0 %v285
        %445 = vmatprep.subr.mxu0 0.0
        %446 = vmatpush1.msra.mxu0 %v286
        %447 = vmatprep.subr.mxu0 0.0
        %448 = vmatpush1.msra.mxu0 %v287
        %449 = vmatprep.subr.mxu0 0.0
        %450 = vmatpush1.msra.mxu0 %v288
        %451 = vmatprep.subr.mxu0 0.0
        %452 = vmatpush1.msra.mxu0 %v289
        %453 = vmatprep.subr.mxu0 0.0
        %454 = vmatpush1.msra.mxu0 %v290
        %455 = vmatprep.subr.mxu0 0.0
        %456 = vmatpush1.msra.mxu0 %v291
        %457 = vmatprep.subr.mxu0 0.0
        %458 = vmatpush1.msra.mxu0 %v292
        %459 = vmatprep.subr.mxu0 0.0
        %460 = vmatpush1.msra.mxu0 %v293
        %461 = vmatprep.subr.mxu0 0.0
        %462 = vmatpush1.msra.mxu0 %v294
        %463 = vmatprep.subr.mxu0 0.0
        %464 = vmatpush1.msra.mxu0 %v295
        %465 = vmatprep.mubr.f32.mxu0 %v263
        %466 = vmatmul.mubr.f32.gmra.mrb[0].mxu0 %v262
        %v467 = vpop.f32.mrb[0].mxu0
        %v468 = vadd.f32 %v398, %v467
        %v469 = vpop.f32.mrb[0].mxu0
        %470 = vdwg.mxu0
        %v471 = vadd.f32 %v261, %v468
        %vm472 = vcmask 130048
        %473 = vst.msk [vmem:[#allocation2] sm:$0xff] %vm472, %v471
        // Predicated region
        $region37: #{tpu_custom_call.1} parent=31 // pred_check
          %p474 = pneg %p255
        $region38: #{tpu_custom_call.1} parent=31 // pred_check_branch
          %476 = sbr.rel (%p474) target = $region40
        $region39: #{tpu_custom_call.1} parent=31 // pred_region
          %v477 = vld [vmem:[#allocation2] sm:$0xff]
          %478 = vst.msk [vmem:[%s228] sm:$0xff] %vm472, %v477
        $region40: #{tpu_custom_call.1} parent=31 // pred_fallthru
          _
        %s479 = sand.u32 %s119, 1
        %s480 = scalar_lea.sflag [#allocation4], %s479
        %s481 = sand.u32 %s119, 1
        %s482 = smul.addr %s481, 8
        %s483 = scalar_lea.vmem [#allocation3], %s482
        // Predicated region
        $region41: #{tpu_custom_call.1} parent=31 // pred_check
          %p484 = pneg %p129
        $region42: #{tpu_custom_call.1} parent=31 // pred_check_branch
          %486 = sbr.rel (%p484) target = $region44
        $region43: #{tpu_custom_call.1} parent=31 // pred_region
          %s488 = ssub.s32 128, 128
          %489 = vsyncadd %s480, %s488
          %s490 = smul.addr %s21, 128
          %s491 = scalar_lea.hbm %s3, %s490
          %s493 = sshll.u32 %s483, 4
          %s494 = int_to_ptr.vmem [resolvable:$true] %s493
          %496 = dma.vmem_to_hbm [thread:$0]  %s494, 128, %s491, %s480
        $region44: #{tpu_custom_call.1} parent=31 // pred_fallthru
          _
      $region32: #{tpu_custom_call.1} parent=5 // pred_fallthru
        _
      %p497 = scmp.le.s32.totalorder 2, %s12
      // Predicated region
      $region45: #{tpu_custom_call.1} parent=5 // pred_check
        %p498 = pneg %p497
      $region46: #{tpu_custom_call.1} parent=5 // pred_check_branch
        %500 = sbr.rel (%p498) target = $region48
      $region47: #{tpu_custom_call.1} parent=5 // pred_region
        %s501 = ssub.s32 %s12, 2
        // Predicated region
        $region49: #{tpu_custom_call.1} parent=47 // pred_check
          %p502 = pneg %p135
        $region50: #{tpu_custom_call.1} parent=47 // pred_check_branch
          %504 = sbr.rel (%p502) target = $region52
        $region51: #{tpu_custom_call.1} parent=47 // pred_region
          %s505 = sand.u32 %s120, 1
          %s506 = scalar_lea.sflag [#allocation4], %s505
          %s507 = sand.u32 %s120, 1
          %s508 = smul.addr %s507, 8
          %s509 = scalar_lea.vmem [#allocation3], %s508
          %510 = dma.done %s506, 128
        $region52: #{tpu_custom_call.1} parent=47 // pred_fallthru
          _
      $region48: #{tpu_custom_call.1} parent=5 // pred_fallthru
        _
    $region6: #{tpu_custom_call.1} parent=1 // loop_footer
      %s16 = sadd.s32 1, %s12
    $region7: #{tpu_custom_call.1} parent=1 // loop_footer_branch
      %11 = sbr.rel target = $region3
    $region8: #{tpu_custom_call.1} parent=1 // loop_exit
      _
    %511 = vsyncpa [#allocation4], 1
    %s512 = scalar_lea.sflag [#allocation4], 1
    %513 = vsyncpa %s512, 1

</llo_original>
